<compile_context>
chip_gen: v5e
topology: v5e:2x2
jax: 0.10.0
libtpu: 0.0.40
codegen_flags: <defaults>
</compile_context>

<pallas_src>
import jax
import jax.numpy as jnp
from jax.experimental import pallas as pl
from jax.experimental.pallas import tpu as pltpu

FIRST_HIDDEN_LAYER = 100
SECOND_HIDDEN_LAYER = 50
OUTPUT_SIZE = 10
OUT_PAD = 128  # lane-dense padded width of the last layer / output block


def _round_up(x, m):
    return (x + m - 1) // m * m


def _secondnet_kernel(x_ref, w0, b0, w1, b1, w2, b2, out_ref):
    """Forward pass for one (TILE_B, image_size) batch tile resident in VMEM."""
    # TODO(synk): training-mode dropout (p=0.1) would need pltpu.prng_seed /
    # prng_random_bits; eval-mode forward treats dropout as identity.

    def linear(h, w_ref, b_ref):
        w = w_ref[...]
        # Cast LHS to the weight dtype (bf16 path stays bf16 on the MXU),
        # accumulate in f32, add bias in f32.
        return (jnp.dot(h.astype(w.dtype), w, preferred_element_type=jnp.float32)
                + b_ref[...].astype(jnp.float32))

    h = x_ref[...]
    h = jax.nn.relu(linear(h, w0, b0))        # fc0 + ReLU   (dropout = identity)
    h = jax.nn.relu(linear(h, w1, b1))        # fc1 + ReLU   (dropout = identity)
    logits = linear(h, w2, b2)                # fc2, padded to OUT_PAD columns

    # Numerically-stable log_softmax restricted to the first OUTPUT_SIZE cols.
    col = jax.lax.broadcasted_iota(jnp.int32, logits.shape, 1)
    valid = col < OUTPUT_SIZE
    masked = jnp.where(valid, logits, -jnp.inf)
    m = jnp.max(masked, axis=-1, keepdims=True)
    shifted = masked - m                                   # padded cols -> -inf
    lse = jnp.log(jnp.sum(jnp.exp(shifted), axis=-1, keepdims=True))
    out_ref[...] = jnp.where(valid, shifted - lse, 0.0).astype(out_ref.dtype)


def secondnet_forward(x, params, *, tile_b=512):
    """x: (B, image_size). params: [(w0,b0),(w1,b1),(w2,b2)], w:(in,out), b:(1,out)."""
    B, D = x.shape
    (w0, b0), (w1, b1), (w2, b2) = params

    # Pad the last layer once to a lane-dense 128-wide output; padded columns
    # are zero and are masked out before the softmax inside the kernel.
    w2p = jnp.pad(w2, ((0, 0), (0, OUT_PAD - w2.shape[1])))
    b2p = jnp.pad(b2, ((0, 0), (0, OUT_PAD - b2.shape[1])))

    # Batch tile: multiple of 8 sublanes, no larger than the (padded) batch.
    tb = min(_round_up(tile_b, 8), _round_up(B, 8))
    padded_B = _round_up(B, tb)
    if padded_B != B:
        x = jnp.pad(x, ((0, padded_B - B), (0, 0)))
    grid = (padded_B // tb,)

    def const_spec(a):
        # Same block index every grid step -> fetched once, VMEM-resident.
        return pl.BlockSpec(a.shape, lambda i: (0,) * a.ndim)

    weights = [w0, b0, w1, b1, w2p, b2p]
    in_specs = ([pl.BlockSpec((tb, D), lambda i: (i, 0))]
                + [const_spec(a) for a in weights])
    out_spec = pl.BlockSpec((tb, OUT_PAD), lambda i: (i, 0))

    weight_bytes = sum(int(a.size) * a.dtype.itemsize for a in weights)
    cost = pl.CostEstimate(
        flops=2 * padded_B * (D * FIRST_HIDDEN_LAYER
                              + FIRST_HIDDEN_LAYER * SECOND_HIDDEN_LAYER
                              + SECOND_HIDDEN_LAYER * OUT_PAD),
        transcendentals=padded_B * OUT_PAD,  # exp inside log_softmax
        bytes_accessed=(padded_B * D * x.dtype.itemsize
                        + weight_bytes
                        + padded_B * OUT_PAD * 4),
    )

    out = pl.pallas_call(
        _secondnet_kernel,
        out_shape=jax.ShapeDtypeStruct((padded_B, OUT_PAD), jnp.float32),
        grid=grid,
        in_specs=in_specs,
        out_specs=out_spec,
        compiler_params=pltpu.CompilerParams(
            dimension_semantics=("parallel",)),  # megacore sharding on v7x
        cost_estimate=cost,
    )(x, *weights)

    return out[:B, :OUTPUT_SIZE]


def init_params(key, image_size):
    """Deterministic init matching the nn.Linear shapes (PyTorch-style uniform)."""
    sizes = [image_size, FIRST_HIDDEN_LAYER, SECOND_HIDDEN_LAYER, OUTPUT_SIZE]
    params = []
    for i in range(len(sizes) - 1):
        fan_in, fan_out = sizes[i], sizes[i + 1]
        key, kw, kb = jax.random.split(key, 3)
        bound = 1.0 / jnp.sqrt(jnp.float32(fan_in))
        w = jax.random.uniform(kw, (fan_in, fan_out), jnp.float32, -bound, bound)
        b = jax.random.uniform(kb, (1, fan_out), jnp.float32, -bound, bound)
        params.append((w, b))
    return params


def reference_forward(x, params):
    (w0, b0), (w1, b1), (w2, b2) = params
    h = jax.nn.relu(x @ w0 + b0)
    h = jax.nn.relu(h @ w1 + b1)
    return jax.nn.log_softmax(h @ w2 + b2, axis=1)


if __name__ == "__main__":
    # Small shapes consistent with the module: batch=2, 1x16x16 "images"
    # flattened to image_size=256 by x.view(-1, image_size).
    B, C, H, W = 2, 1, 16, 16
    image_size = C * H * W

    key = jax.random.PRNGKey(0)
    key, kx = jax.random.split(key)
    x_nchw = jax.random.normal(kx, (B, C, H, W), jnp.float32)
    x = x_nchw.reshape(-1, image_size)  # == torch's x.view(-1, image_size)

    params = init_params(key, image_size)

    out = jax.block_until_ready(secondnet_forward(x, params))
    ref = reference_forward(x, params)
    assert out.shape == (B, OUTPUT_SIZE)
    assert jnp.allclose(out, ref, atol=2e-5, rtol=2e-5), "mismatch vs JAX reference (small batch)"

    # Also exercise the multi-step pipelined grid path (padding + 3 grid steps).
    key, kx2 = jax.random.split(key)
    x_big = jax.random.normal(kx2, (600, image_size), jnp.float32)
    out_big = jax.block_until_ready(secondnet_forward(x_big, params, tile_b=256))
    ref_big = reference_forward(x_big, params)
    assert out_big.shape == (600, OUTPUT_SIZE)
    assert jnp.allclose(out_big, ref_big, atol=2e-5, rtol=2e-5), "mismatch vs JAX reference (grid)"

    print("KERNEL_OK")
</pallas_src>

<mosaic_0001>
module attributes {stable_mosaic.version = 11 : i64} {
  func.func @_secondnet_kernel(%arg0: i32, %arg1: memref<8x256xf32, #tpu.memory_space<vmem>>, %arg2: memref<256x100xf32, #tpu.memory_space<vmem>>, %arg3: memref<1x100xf32, #tpu.memory_space<vmem>>, %arg4: memref<100x50xf32, #tpu.memory_space<vmem>>, %arg5: memref<1x50xf32, #tpu.memory_space<vmem>>, %arg6: memref<50x128xf32, #tpu.memory_space<vmem>>, %arg7: memref<1x128xf32, #tpu.memory_space<vmem>>, %arg8: memref<8x128xf32, #tpu.memory_space<vmem>>) attributes {dimension_semantics = [#tpu.dimension_semantics<parallel>], iteration_bounds = array<i64: 1>, scalar_prefetch = 0 : i64, scratch_operands = 0 : i64, tpu.core_type = #tpu.core_type<tc>, window_params = [{transform_indices = @transform_0, window_bounds = array<i64: 8, 256>}, {pipeline_mode = #tpu.pipeline_mode<synchronous>, transform_indices = @transform_1, window_bounds = array<i64: 256, 100>}, {pipeline_mode = #tpu.pipeline_mode<synchronous>, transform_indices = @transform_2, window_bounds = array<i64: 1, 100>}, {pipeline_mode = #tpu.pipeline_mode<synchronous>, transform_indices = @transform_3, window_bounds = array<i64: 100, 50>}, {pipeline_mode = #tpu.pipeline_mode<synchronous>, transform_indices = @transform_4, window_bounds = array<i64: 1, 50>}, {pipeline_mode = #tpu.pipeline_mode<synchronous>, transform_indices = @transform_5, window_bounds = array<i64: 50, 128>}, {pipeline_mode = #tpu.pipeline_mode<synchronous>, transform_indices = @transform_6, window_bounds = array<i64: 1, 128>}, {transform_indices = @transform_7, window_bounds = array<i64: 8, 128>}]} {
    %c0 = arith.constant 0 : index
    %c0_0 = arith.constant 0 : index
    %0 = vector.load %arg1[%c0, %c0_0] : memref<8x256xf32, #tpu.memory_space<vmem>>, vector<8x256xf32>
    %c0_1 = arith.constant 0 : index
    %c0_2 = arith.constant 0 : index
    %1 = vector.load %arg2[%c0_1, %c0_2] : memref<256x100xf32, #tpu.memory_space<vmem>>, vector<256x100xf32>
    %cst = arith.constant dense<0.000000e+00> : vector<8x100xf32>
    %2 = tpu.matmul %0, %1, %cst {dimension_numbers = #tpu.dot_dimension_numbers<[1], [0], [0], [1], [0, 0, 1, 1], [], []>} : vector<8x256xf32>, vector<256x100xf32>, vector<8x100xf32> -> vector<8x100xf32>
    %c0_3 = arith.constant 0 : index
    %c0_4 = arith.constant 0 : index
    %3 = vector.load %arg3[%c0_3, %c0_4] : memref<1x100xf32, #tpu.memory_space<vmem>>, vector<1x100xf32>
    %4 = vector.broadcast %3 : vector<1x100xf32> to vector<8x100xf32>
    %5 = arith.addf %2, %4 : vector<8x100xf32>
    %cst_5 = arith.constant 0.000000e+00 : f32
    %6 = vector.broadcast %cst_5 : f32 to vector<8x100xf32>
    %7 = arith.maximumf %5, %6 : vector<8x100xf32>
    %c0_6 = arith.constant 0 : index
    %c0_7 = arith.constant 0 : index
    %8 = vector.load %arg4[%c0_6, %c0_7] : memref<100x50xf32, #tpu.memory_space<vmem>>, vector<100x50xf32>
    %cst_8 = arith.constant dense<0.000000e+00> : vector<8x50xf32>
    %9 = tpu.matmul %7, %8, %cst_8 {dimension_numbers = #tpu.dot_dimension_numbers<[1], [0], [0], [1], [0, 0, 1, 1], [], []>} : vector<8x100xf32>, vector<100x50xf32>, vector<8x50xf32> -> vector<8x50xf32>
    %c0_9 = arith.constant 0 : index
    %c0_10 = arith.constant 0 : index
    %10 = vector.load %arg5[%c0_9, %c0_10] : memref<1x50xf32, #tpu.memory_space<vmem>>, vector<1x50xf32>
    %11 = vector.broadcast %10 : vector<1x50xf32> to vector<8x50xf32>
    %12 = arith.addf %9, %11 : vector<8x50xf32>
    %cst_11 = arith.constant 0.000000e+00 : f32
    %13 = vector.broadcast %cst_11 : f32 to vector<8x50xf32>
    %14 = arith.maximumf %12, %13 : vector<8x50xf32>
    %c0_12 = arith.constant 0 : index
    %c0_13 = arith.constant 0 : index
    %15 = vector.load %arg6[%c0_12, %c0_13] : memref<50x128xf32, #tpu.memory_space<vmem>>, vector<50x128xf32>
    %cst_14 = arith.constant dense<0.000000e+00> : vector<8x128xf32>
    %16 = tpu.matmul %14, %15, %cst_14 {dimension_numbers = #tpu.dot_dimension_numbers<[1], [0], [0], [1], [0, 0, 1, 1], [], []>} : vector<8x50xf32>, vector<50x128xf32>, vector<8x128xf32> -> vector<8x128xf32>
    %c0_15 = arith.constant 0 : index
    %c0_16 = arith.constant 0 : index
    %17 = vector.load %arg7[%c0_15, %c0_16] : memref<1x128xf32, #tpu.memory_space<vmem>>, vector<1x128xf32>
    %18 = vector.broadcast %17 : vector<1x128xf32> to vector<8x128xf32>
    %19 = arith.addf %16, %18 : vector<8x128xf32>
    %20 = tpu.iota {dimensions = array<i32: 1>} : vector<8x128xi32>
    %c10_i32 = arith.constant 10 : i32
    %21 = vector.broadcast %c10_i32 : i32 to vector<8x128xi32>
    %22 = arith.cmpi slt, %20, %21 : vector<8x128xi32>
    %cst_17 = arith.constant 0xFF800000 : f32
    %23 = vector.broadcast %cst_17 : f32 to vector<8x128xf32>
    %24 = arith.select %22, %19, %23 : vector<8x128xi1>, vector<8x128xf32>
    %cst_18 = arith.constant dense<0xFF800000> : vector<8xf32>
    %25 = vector.multi_reduction <maximumf>, %24, %cst_18 [1] : vector<8x128xf32> to vector<8xf32>
    %26 = vector.shape_cast %25 : vector<8xf32> to vector<8x1xf32>
    %27 = vector.broadcast %26 : vector<8x1xf32> to vector<8x128xf32>
    %28 = arith.subf %24, %27 : vector<8x128xf32>
    %29 = math.exp %28 : vector<8x128xf32>
    %cst_19 = arith.constant dense<0.000000e+00> : vector<8xf32>
    %30 = vector.multi_reduction <add>, %29, %cst_19 [1] : vector<8x128xf32> to vector<8xf32>
    %31 = vector.shape_cast %30 : vector<8xf32> to vector<8x1xf32>
    %32 = math.log %31 : vector<8x1xf32>
    %33 = vector.broadcast %32 : vector<8x1xf32> to vector<8x128xf32>
    %34 = arith.subf %28, %33 : vector<8x128xf32>
    %cst_20 = arith.constant 0.000000e+00 : f32
    %35 = vector.broadcast %cst_20 : f32 to vector<8x128xf32>
    %36 = arith.select %22, %34, %35 : vector<8x128xi1>, vector<8x128xf32>
    %c0_21 = arith.constant 0 : index
    %c0_22 = arith.constant 0 : index
    %37 = vector.load %arg8[%c0_21, %c0_22] : memref<8x128xf32, #tpu.memory_space<vmem>>, vector<8x128xf32>
    tpu.vector_store %arg8[%c0_21, %c0_22], %36 {strides = array<i32>} : memref<8x128xf32, #tpu.memory_space<vmem>>, vector<8x128xf32>,
    return
  }
  func.func @transform_0(%arg0: i32) -> (i32, i32) {
    %c0_i32 = arith.constant 0 : i32
    %c0_i32_0 = arith.constant 0 : i32
    return %arg0, %c0_i32 : i32, i32
  }
  func.func @transform_1(%arg0: i32) -> (i32, i32) {
    %c0_i32 = arith.constant 0 : i32
    %c0_i32_0 = arith.constant 0 : i32
    %c0_i32_1 = arith.constant 0 : i32
    return %c0_i32, %c0_i32_0 : i32, i32
  }
  func.func @transform_2(%arg0: i32) -> (i32, i32) {
    %c0_i32 = arith.constant 0 : i32
    %c0_i32_0 = arith.constant 0 : i32
    %c0_i32_1 = arith.constant 0 : i32
    return %c0_i32, %c0_i32_0 : i32, i32
  }
  func.func @transform_3(%arg0: i32) -> (i32, i32) {
    %c0_i32 = arith.constant 0 : i32
    %c0_i32_0 = arith.constant 0 : i32
    %c0_i32_1 = arith.constant 0 : i32
    return %c0_i32, %c0_i32_0 : i32, i32
  }
  func.func @transform_4(%arg0: i32) -> (i32, i32) {
    %c0_i32 = arith.constant 0 : i32
    %c0_i32_0 = arith.constant 0 : i32
    %c0_i32_1 = arith.constant 0 : i32
    return %c0_i32, %c0_i32_0 : i32, i32
  }
  func.func @transform_5(%arg0: i32) -> (i32, i32) {
    %c0_i32 = arith.constant 0 : i32
    %c0_i32_0 = arith.constant 0 : i32
    %c0_i32_1 = arith.constant 0 : i32
    return %c0_i32, %c0_i32_0 : i32, i32
  }
  func.func @transform_6(%arg0: i32) -> (i32, i32) {
    %c0_i32 = arith.constant 0 : i32
    %c0_i32_0 = arith.constant 0 : i32
    %c0_i32_1 = arith.constant 0 : i32
    return %c0_i32, %c0_i32_0 : i32, i32
  }
  func.func @transform_7(%arg0: i32) -> (i32, i32) {
    %c0_i32 = arith.constant 0 : i32
    %c0_i32_0 = arith.constant 0 : i32
    return %arg0, %c0_i32 : i32, i32
  }
}

</mosaic_0001>

<llo_original>
// kernel: tpu_custom_call.1
$region0: #{tpu_custom_call.1}
  #allocation0 [shape = 'u32[]', space=smem, size = 0x4, offset = 0x4, fixed_abs, tag = 'smem constant byte address 0x4 - core index']
  #allocation1 [shape = 'u32[72,128]{1,0:T(1,128)}', space=vmem, size = 0x9000, scoped, tag = 'internal scratch']
  %s0 = inlined_call_operand.vmem [shape: f32[8,256], index: 0, kind: input, shape index: {}]
  %s1 = inlined_call_operand.vmem [shape: f32[256,100], index: 1, kind: input, shape index: {}]
  %s2 = inlined_call_operand.vmem [shape: f32[1,100], index: 2, kind: input, shape index: {}]
  %s3 = inlined_call_operand.vmem [shape: f32[100,50], index: 3, kind: input, shape index: {}]
  %s4 = inlined_call_operand.vmem [shape: f32[1,50], index: 4, kind: input, shape index: {}]
  %s5 = inlined_call_operand.vmem [shape: f32[50,128], index: 5, kind: input, shape index: {}]
  %s6 = inlined_call_operand.vmem [shape: f32[1,128], index: 6, kind: input, shape index: {}]
  %s7 = inlined_call_operand.hbm [shape: f32[8,128], index: 7, kind: output, shape index: {}]
  %s8 = sld [smem:[#allocation0]]
  $region38: #{tpu_custom_call.1} parent=0
    _
  %s10 = ssub.s32 1, %s8
  %s11 = scalar_select 0, %s10, %s8
  $region1: #{tpu_custom_call.1} parent=0
    #allocation2 [shape = 'u8[4096]{0}', space=vmem, size = 0x1000, scoped, tag = 'output window, operand 0, single buffered']
    #allocation3 [shape = 's32[1]{0}', space=sflag, size = 0x4, scoped, tag = 'scoped memory for tpu_custom_call.1']
    %12 = vsyncpa [#allocation3], 0
    // Predicated region
    $region2: #{tpu_custom_call.1} parent=1 // pred_check
      _
    $region3: #{tpu_custom_call.1} parent=1 // pred_check_branch
      %14 = sbr.rel (0) target = $region5
    $region4: #{tpu_custom_call.1} parent=1 // pred_region
      _
    $region5: #{tpu_custom_call.1} parent=1 // pred_fallthru
      _
    // Predicated region
    $region6: #{tpu_custom_call.1} parent=1 // pred_check
      _
    $region7: #{tpu_custom_call.1} parent=1 // pred_check_branch
      %16 = sbr.rel (0) target = $region9
    $region8: #{tpu_custom_call.1} parent=1 // pred_region
      _
    $region9: #{tpu_custom_call.1} parent=1 // pred_fallthru
      _
    // Predicated region
    $region10: #{tpu_custom_call.1} parent=1 // pred_check
      _
    $region11: #{tpu_custom_call.1} parent=1 // pred_check_branch
      %18 = sbr.rel (0) target = $region13
    $region12: #{tpu_custom_call.1} parent=1 // pred_region
      _
    $region13: #{tpu_custom_call.1} parent=1 // pred_fallthru
      _
    // Predicated region
    $region14: #{tpu_custom_call.1} parent=1 // pred_check
      _
    $region15: #{tpu_custom_call.1} parent=1 // pred_check_branch
      %20 = sbr.rel (0) target = $region17
    $region16: #{tpu_custom_call.1} parent=1 // pred_region
      _
    $region17: #{tpu_custom_call.1} parent=1 // pred_fallthru
      _
    // Predicated region
    $region18: #{tpu_custom_call.1} parent=1 // pred_check
      _
    $region19: #{tpu_custom_call.1} parent=1 // pred_check_branch
      %22 = sbr.rel (0) target = $region21
    $region20: #{tpu_custom_call.1} parent=1 // pred_region
      _
    $region21: #{tpu_custom_call.1} parent=1 // pred_fallthru
      _
    // Predicated region
    $region22: #{tpu_custom_call.1} parent=1 // pred_check
      _
    $region23: #{tpu_custom_call.1} parent=1 // pred_check_branch
      %24 = sbr.rel (0) target = $region25
    $region24: #{tpu_custom_call.1} parent=1 // pred_region
      _
    $region25: #{tpu_custom_call.1} parent=1 // pred_fallthru
      _
    // Predicated region
    $region26: #{tpu_custom_call.1} parent=1 // pred_check
      _
    $region27: #{tpu_custom_call.1} parent=1 // pred_check_branch
      %26 = sbr.rel (0) target = $region29
    $region28: #{tpu_custom_call.1} parent=1 // pred_region
      _
    $region29: #{tpu_custom_call.1} parent=1 // pred_fallthru
      _
    %v27 = vld [vmem:[%s0] sm:$0xff]
    %v28 = vld [vmem:[%s0 + $0x8] sm:$0xff]
    %v29 = vld [vmem:[%s1] sm:$0xff]
    %v30 = vld [vmem:[%s1 + $0x8] sm:$0xff]
    %v31 = vld [vmem:[%s1 + $0x10] sm:$0xff]
    %v32 = vld [vmem:[%s1 + $0x18] sm:$0xff]
    %v33 = vld [vmem:[%s1 + $0x20] sm:$0xff]
    %v34 = vld [vmem:[%s1 + $0x28] sm:$0xff]
    %v35 = vld [vmem:[%s1 + $0x30] sm:$0xff]
    %v36 = vld [vmem:[%s1 + $0x38] sm:$0xff]
    %v37 = vld [vmem:[%s1 + $0x40] sm:$0xff]
    %v38 = vld [vmem:[%s1 + $0x48] sm:$0xff]
    %v39 = vld [vmem:[%s1 + $0x50] sm:$0xff]
    %v40 = vld [vmem:[%s1 + $0x58] sm:$0xff]
    %v41 = vld [vmem:[%s1 + $0x60] sm:$0xff]
    %v42 = vld [vmem:[%s1 + $0x68] sm:$0xff]
    %v43 = vld [vmem:[%s1 + $0x70] sm:$0xff]
    %v44 = vld [vmem:[%s1 + $0x78] sm:$0xff]
    %v45 = vld [vmem:[%s1 + $0x80] sm:$0xff]
    %v46 = vld [vmem:[%s1 + $0x88] sm:$0xff]
    %v47 = vld [vmem:[%s1 + $0x90] sm:$0xff]
    %v48 = vld [vmem:[%s1 + $0x98] sm:$0xff]
    %v49 = vld [vmem:[%s1 + $0xa0] sm:$0xff]
    %v50 = vld [vmem:[%s1 + $0xa8] sm:$0xff]
    %v51 = vld [vmem:[%s1 + $0xb0] sm:$0xff]
    %v52 = vld [vmem:[%s1 + $0xb8] sm:$0xff]
    %v53 = vld [vmem:[%s1 + $0xc0] sm:$0xff]
    %v54 = vld [vmem:[%s1 + $0xc8] sm:$0xff]
    %v55 = vld [vmem:[%s1 + $0xd0] sm:$0xff]
    %v56 = vld [vmem:[%s1 + $0xd8] sm:$0xff]
    %v57 = vld [vmem:[%s1 + $0xe0] sm:$0xff]
    %v58 = vld [vmem:[%s1 + $0xe8] sm:$0xff]
    %v59 = vld [vmem:[%s1 + $0xf0] sm:$0xff]
    %v60 = vld [vmem:[%s1 + $0xf8] sm:$0xff]
    %v61 = vld [vmem:[%s2] sm:$0x1]
    %v63 = vperm.slane %v61, 0
    %65 = vmatpush.msra.mxu0 %v44
    %66 = vmatpush.msra.mxu0 %v43
    %67 = vmatpush.msra.mxu0 %v42
    %68 = vmatpush.msra.mxu0 %v41
    %69 = vmatpush.msra.mxu0 %v40
    %70 = vmatpush.msra.mxu0 %v39
    %71 = vmatpush.msra.mxu0 %v38
    %72 = vmatpush.msra.mxu0 %v37
    %73 = vmatpush.msra.mxu0 %v36
    %74 = vmatpush.msra.mxu0 %v35
    %75 = vmatpush.msra.mxu0 %v34
    %76 = vmatpush.msra.mxu0 %v33
    %77 = vmatpush.msra.mxu0 %v32
    %78 = vmatpush.msra.mxu0 %v31
    %79 = vmatpush.msra.mxu0 %v30
    %80 = vmatpush.msra.mxu0 %v29
    %81 = vmatmul.f32.gmra.mxu0 %v27
    %v82 = vpop.f32.mrf.mxu0
    %v83 = vadd.f32 %v63, %v82
    %84 = vdwg.mxu0
    %85 = vmatpush.msra.mxu0 %v60
    %86 = vmatpush.msra.mxu0 %v59
    %87 = vmatpush.msra.mxu0 %v58
    %88 = vmatpush.msra.mxu0 %v57
    %89 = vmatpush.msra.mxu0 %v56
    %90 = vmatpush.msra.mxu0 %v55
    %91 = vmatpush.msra.mxu0 %v54
    %92 = vmatpush.msra.mxu0 %v53
    %93 = vmatpush.msra.mxu0 %v52
    %94 = vmatpush.msra.mxu0 %v51
    %95 = vmatpush.msra.mxu0 %v50
    %96 = vmatpush.msra.mxu0 %v49
    %97 = vmatpush.msra.mxu0 %v48
    %98 = vmatpush.msra.mxu0 %v47
    %99 = vmatpush.msra.mxu0 %v46
    %100 = vmatpush.msra.mxu0 %v45
    %101 = vmatmul.f32.gmra.mxu0 %v28
    %v102 = vpop.f32.mrf.mxu0
    %v103 = vadd.f32 %v83, %v102
    %104 = vdwg.mxu0
    %v105 = vmax.f32 %v103, 0.0
    %v106 = vld [vmem:[%s3] sm:$0xff]
    %v107 = vld [vmem:[%s3 + $0x8] sm:$0xff]
    %v108 = vld [vmem:[%s3 + $0x10] sm:$0xff]
    %v109 = vld [vmem:[%s3 + $0x18] sm:$0xff]
    %v110 = vld [vmem:[%s3 + $0x20] sm:$0xff]
    %v111 = vld [vmem:[%s3 + $0x28] sm:$0xff]
    %v112 = vld [vmem:[%s3 + $0x30] sm:$0xff]
    %v113 = vld [vmem:[%s3 + $0x38] sm:$0xff]
    %v114 = vld [vmem:[%s3 + $0x40] sm:$0xff]
    %v115 = vld [vmem:[%s3 + $0x48] sm:$0xff]
    %v116 = vld [vmem:[%s3 + $0x50] sm:$0xff]
    %v117 = vld [vmem:[%s3 + $0x58] sm:$0xff]
    %v118 = vld [vmem:[%s3 + $0x60] sm:$0xf]
    %v119 = vld [vmem:[%s4] sm:$0x1]
    %v121 = vperm.slane %v119, 0
    %vm123 = vcmask 818176
    %v125 = vsel %vm123, %v105, 0
    %vm127 = vcmask 1043456
    %v129 = vsel %vm127, %v118, 0
    %131 = vmatpush.msra.mxu0 0.0
    %132 = vmatpush.msra.mxu0 0.0
    %133 = vmatpush.msra.mxu0 0.0
    %134 = vmatpush.msra.mxu0 %v129
    %135 = vmatpush.msra.mxu0 %v117
    %136 = vmatpush.msra.mxu0 %v116
    %137 = vmatpush.msra.mxu0 %v115
    %138 = vmatpush.msra.mxu0 %v114
    %139 = vmatpush.msra.mxu0 %v113
    %140 = vmatpush.msra.mxu0 %v112
    %141 = vmatpush.msra.mxu0 %v111
    %142 = vmatpush.msra.mxu0 %v110
    %143 = vmatpush.msra.mxu0 %v109
    %144 = vmatpush.msra.mxu0 %v108
    %145 = vmatpush.msra.mxu0 %v107
    %146 = vmatpush.msra.mxu0 %v106
    %147 = vmatmul.f32.gmra.mxu0 %v125
    %v148 = vpop.f32.mrf.mxu0
    %v149 = vadd.f32 %v121, %v148
    %150 = vdwg.mxu0
    %v151 = vmax.f32 %v149, 0.0
    %v152 = vld [vmem:[%s5] sm:$0xff]
    %v153 = vld [vmem:[%s5 + $0x8] sm:$0xff]
    %v154 = vld [vmem:[%s5 + $0x10] sm:$0xff]
    %v155 = vld [vmem:[%s5 + $0x18] sm:$0xff]
    %v156 = vld [vmem:[%s5 + $0x20] sm:$0xff]
    %v157 = vld [vmem:[%s5 + $0x28] sm:$0xff]
    %v158 = vld [vmem:[%s5 + $0x30] sm:$0x3]
    %v159 = vld [vmem:[%s6] sm:$0x1]
    %v161 = vperm.slane %v159, 0
    %vm163 = vcmask 408576
    %v165 = vsel %vm163, %v151, 0
    %vm167 = vcmask 1041408
    %v169 = vsel %vm167, %v158, 0
    %171 = vmatpush.msra.mxu0 0.0
    %172 = vmatpush.msra.mxu0 0.0
    %173 = vmatpush.msra.mxu0 0.0
    %174 = vmatpush.msra.mxu0 0.0
    %175 = vmatpush.msra.mxu0 0.0
    %176 = vmatpush.msra.mxu0 0.0
    %177 = vmatpush.msra.mxu0 0.0
    %178 = vmatpush.msra.mxu0 0.0
    %179 = vmatpush.msra.mxu0 0.0
    %180 = vmatpush.msra.mxu0 %v169
    %181 = vmatpush.msra.mxu0 %v157
    %182 = vmatpush.msra.mxu0 %v156
    %183 = vmatpush.msra.mxu0 %v155
    %184 = vmatpush.msra.mxu0 %v154
    %185 = vmatpush.msra.mxu0 %v153
    %186 = vmatpush.msra.mxu0 %v152
    %187 = vmatmul.f32.gmra.mxu0 %v165
    %v188 = vpop.f32.mrf.mxu0
    %v189 = vadd.f32 %v161, %v188
    %190 = vdwg.mxu0
    %v191 = vlaneseq
    %v192 = vand.u32 %v191, 127
    %vm193 = vcmp.lt.s32.totalorder %v192, 10
    %v194 = vsel %vm193, %v189, -inf
    %195 = vmax.xlane.f32.xlu0 %v194
    %v196 = vpop.xlane.xlu0 %195
    %v197 = vsub.f32 %v194, %v196
    %v198 = vmul.f32 %v197, 1.442695
    %v199 = vpow.pop %v198
    %200 = vadd.xlane.f32.xlu0 %v199
    %v201 = vpop.xlane.xlu0 %200
    %v202 = vlog2.pop %v201
    %v203 = vmul.f32 %v202, 0.6931472
    %v204 = vsub.f32 %v197, %v203
    %v205 = vsel %vm193, %v204, 0.0
    %206 = vst [vmem:[#allocation2] sm:$0xff] %v205
    // Predicated region
    $region30: #{tpu_custom_call.1} parent=1 // pred_check
      _
    $region31: #{tpu_custom_call.1} parent=1 // pred_check_branch
      %208 = sbr.rel (0) target = $region33
    $region32: #{tpu_custom_call.1} parent=1 // pred_region
      %210 = vsyncadd [#allocation3], 0
      %s212 = sshll.u32 [#allocation2], 4
      %s213 = int_to_ptr.vmem [resolvable:$true] %s212
      %s214 = sshll.u32 %s7, 4
      %s215 = int_to_ptr.hbm [resolvable:$true] %s214
      %217 = dma.vmem_to_hbm [thread:$0]  %s213, 128, %s215, [#allocation3]
    $region33: #{tpu_custom_call.1} parent=1 // pred_fallthru
      _
    // Predicated region
    $region34: #{tpu_custom_call.1} parent=1 // pred_check
      _
    $region35: #{tpu_custom_call.1} parent=1 // pred_check_branch
      %219 = sbr.rel (0) target = $region37
    $region36: #{tpu_custom_call.1} parent=1 // pred_region
      %221 = dma.done [#allocation3], 128
    $region37: #{tpu_custom_call.1} parent=1 // pred_fallthru
      _
    %222 = vsyncpa [#allocation3], 1

</llo_original>
